<compile_context>
chip_gen: v7x
topology: tpu7x:2x2x1
jax: 0.10.0
libtpu: 0.0.40
codegen_flags: <defaults>
</compile_context>

<pallas_src>
import functools

import jax
import jax.numpy as jnp
from jax.experimental import pallas as pl
from jax.experimental.pallas import tpu as pltpu


def _cdiv(a: int, b: int) -> int:
    return (a + b - 1) // b


def _round_up(a: int, b: int) -> int:
    return _cdiv(a, b) * b


# ---------------------------------------------------------------------------
# Kernels
# ---------------------------------------------------------------------------
def _ssam_onepass_kernel(x_ref, xc_ref, yc_ref, o_ref):
    """Single reduction chunk: plain softmax + weighted means in one pass."""
    x = x_ref[...].astype(jnp.float32)                    # (row_tile, hw)
    m = jnp.max(x, axis=-1, keepdims=True)
    p = jnp.exp(x - m)                                    # unnormalized softmax
    s = jnp.sum(p, axis=-1, keepdims=True)
    wx = jnp.sum(p * xc_ref[...], axis=-1, keepdims=True)
    wy = jnp.sum(p * yc_ref[...], axis=-1, keepdims=True)
    o_ref[:, 0:1] = (wx / s).astype(o_ref.dtype)
    o_ref[:, 1:2] = (wy / s).astype(o_ref.dtype)


def _ssam_online_kernel(x_ref, xc_ref, yc_ref, o_ref,
                        m_sc, s_sc, wx_sc, wy_sc, *, hw, hw_chunk):
    """Online-softmax reduction over the H*W axis (large feature maps)."""
    k = pl.program_id(1)

    @pl.when(k == 0)
    def _():
        m_sc[...] = jnp.full_like(m_sc, -jnp.inf)
        s_sc[...] = jnp.zeros_like(s_sc)
        wx_sc[...] = jnp.zeros_like(wx_sc)
        wy_sc[...] = jnp.zeros_like(wy_sc)

    x = x_ref[...].astype(jnp.float32)                    # (row_tile, hw_chunk)
    if hw % hw_chunk != 0:
        # The last chunk is partial; neutralise out-of-bounds lanes so the
        # running max / exp are not polluted by garbage block padding.
        lane = jax.lax.broadcasted_iota(jnp.int32, (1, x.shape[-1]), 1)
        valid = (k * hw_chunk + lane) < hw
        x = jnp.where(valid, x, -jnp.inf)

    xc = xc_ref[...]                                      # (1, hw_chunk) f32
    yc = yc_ref[...]                                      # (1, hw_chunk) f32

    m_prev = m_sc[...]
    m_new = jnp.maximum(m_prev, jnp.max(x, axis=-1, keepdims=True))
    alpha = jnp.exp(m_prev - m_new)                       # rescale old accumulators
    p = jnp.exp(x - m_new)

    s_sc[...] = alpha * s_sc[...] + jnp.sum(p, axis=-1, keepdims=True)
    wx_sc[...] = alpha * wx_sc[...] + jnp.sum(p * xc, axis=-1, keepdims=True)
    wy_sc[...] = alpha * wy_sc[...] + jnp.sum(p * yc, axis=-1, keepdims=True)
    m_sc[...] = m_new

    @pl.when(k == pl.num_programs(1) - 1)
    def _():
        s = s_sc[...]
        o_ref[:, 0:1] = (wx_sc[...] / s).astype(o_ref.dtype)
        o_ref[:, 1:2] = (wy_sc[...] / s).astype(o_ref.dtype)


# ---------------------------------------------------------------------------
# Wrapper
# ---------------------------------------------------------------------------
def _coord_vectors(h: int, w: int, normalize: bool):
    """Flattened coordinate vectors matching torch.meshgrid(...).flatten()."""
    if normalize:
        cw = jnp.linspace(-1.0, 1.0, w, dtype=jnp.float32)
        ch = jnp.linspace(-1.0, 1.0, h, dtype=jnp.float32)
    else:
        cw = jnp.arange(w, dtype=jnp.float32)
        ch = jnp.arange(h, dtype=jnp.float32)
    xc = jnp.repeat(cw, h)   # xc[k] = cw[k // h]
    yc = jnp.tile(ch, w)     # yc[k] = ch[k % h]
    return xc, yc


_TARGET_BLOCK_BYTES = 8 * 1024 * 1024     # preferred per-buffer block size
_MAX_ONEPASS_BYTES = 12 * 1024 * 1024     # max block for the one-pass path
_VMEM_LIMIT_BYTES = 48 * 1024 * 1024      # < 64 MiB physical on v7x


@functools.partial(jax.jit, static_argnames=("normalize", "_force_hw_chunk"))
def spatial_soft_argmax(x: jax.Array, normalize: bool = False,
                        *, _force_hw_chunk=None) -> jax.Array:
    """x: (N, C, H, W) -> (N, 2*C), matching SpatialSoftArgmax.forward."""
    n, c, h, w = x.shape
    hw = h * w
    rows = n * c
    itemsize = jnp.dtype(x.dtype).itemsize

    x2 = x.reshape(rows, hw)                    # no padding, no extra HBM pass
    xc, yc = _coord_vectors(h, w, normalize)    # (hw,) f32 each

    # One-pass path whenever even an 8-row block holding the full H*W axis
    # stays within the single-block budget (covers all typical feature maps).
    single = (_force_hw_chunk is None) and (8 * hw * itemsize <= _MAX_ONEPASS_BYTES)

    common_kwargs = dict(
        out_shape=jax.ShapeDtypeStruct((rows, 2), x.dtype),
    )

    if single:
        hw_chunk = hw
        max_rows = max(8, (_TARGET_BLOCK_BYTES // max(1, hw * itemsize)) // 8 * 8)
        if rows <= 8:
            row_tile = rows                      # == full dim -> legal
        elif rows <= max_rows:
            # Fits in one tile: still split in two so the parallel row axis
            # can shard across v7x's two TensorCores (free on v5e/v6e).
            row_tile = _round_up(_cdiv(rows, 2), 8)
        else:
            row_tile = max_rows                  # multiple of 8 -> legal

        out = pl.pallas_call(
            _ssam_onepass_kernel,
            grid_spec=pltpu.PrefetchScalarGridSpec(
                num_scalar_prefetch=0,
                grid=(_cdiv(rows, row_tile),),
                in_specs=[
                    pl.BlockSpec((row_tile, hw), lambda i: (i, 0)),
                    pl.BlockSpec((1, hw), lambda i: (0, 0)),   # resident, 1 DMA
                    pl.BlockSpec((1, hw), lambda i: (0, 0)),   # resident, 1 DMA
                ],
                out_specs=pl.BlockSpec((row_tile, 2), lambda i: (i, 0)),
            ),
            compiler_params=pltpu.CompilerParams(
                dimension_semantics=("parallel",),
                vmem_limit_bytes=_VMEM_LIMIT_BYTES,
            ),
            **common_kwargs,
        )(x2, xc.reshape(1, hw), yc.reshape(1, hw))
    else:
        # Huge feature maps: online-softmax reduction over H*W chunks.
        if rows <= 8:
            row_tile = rows
        elif rows <= 256:
            row_tile = _round_up(_cdiv(rows, 2), 8)   # >= 2 tiles for v7x
        else:
            row_tile = 256

        if _force_hw_chunk is not None:
            hw_chunk = int(_force_hw_chunk)           # must be a multiple of 128
        else:
            hw_chunk = max(128, (_TARGET_BLOCK_BYTES // (row_tile * itemsize)) // 128 * 128)
            hw_chunk = min(hw_chunk, _round_up(hw, 128))
        grid_k = _cdiv(hw, hw_chunk)
        hw_pad = grid_k * hw_chunk

        # Only the tiny (hw,) coordinate vectors are padded (keeps the padded
        # lanes well-defined zeros); the big feature tensor is never padded.
        xc_p = jnp.pad(xc, (0, hw_pad - hw)).reshape(1, hw_pad)
        yc_p = jnp.pad(yc, (0, hw_pad - hw)).reshape(1, hw_pad)

        kernel = functools.partial(_ssam_online_kernel, hw=hw, hw_chunk=hw_chunk)
        out = pl.pallas_call(
            kernel,
            grid_spec=pltpu.PrefetchScalarGridSpec(
                num_scalar_prefetch=0,
                grid=(_cdiv(rows, row_tile), grid_k),
                in_specs=[
                    pl.BlockSpec((row_tile, hw_chunk), lambda i, k: (i, k)),
                    pl.BlockSpec((1, hw_chunk), lambda i, k: (0, k)),
                    pl.BlockSpec((1, hw_chunk), lambda i, k: (0, k)),
                ],
                out_specs=pl.BlockSpec((row_tile, 2), lambda i, k: (i, 0)),
                scratch_shapes=[
                    pltpu.VMEM((row_tile, 1), jnp.float32),   # running max
                    pltpu.VMEM((row_tile, 1), jnp.float32),   # denom
                    pltpu.VMEM((row_tile, 1), jnp.float32),   # weighted x sum
                    pltpu.VMEM((row_tile, 1), jnp.float32),   # weighted y sum
                ],
            ),
            compiler_params=pltpu.CompilerParams(
                dimension_semantics=("parallel", "arbitrary"),
                vmem_limit_bytes=_VMEM_LIMIT_BYTES,
            ),
            **common_kwargs,
        )(x2, xc_p, yc_p)

    return out.reshape(n, 2 * c)


# ---------------------------------------------------------------------------
# Pure-JAX reference (mirrors the PyTorch forward) and self-test
# ---------------------------------------------------------------------------
def _ssam_reference(x: jax.Array, normalize: bool = False) -> jax.Array:
    n, c, h, w = x.shape
    xf = x.reshape(-1, h * w).astype(jnp.float32)
    sm = jax.nn.softmax(xf, axis=-1)
    xc, yc = _coord_vectors(h, w, normalize)
    x_mean = jnp.sum(sm * xc, axis=1, keepdims=True)
    y_mean = jnp.sum(sm * yc, axis=1, keepdims=True)
    return jnp.concatenate([x_mean, y_mean], axis=1).reshape(n, 2 * c).astype(x.dtype)


if __name__ == "__main__":
    key = jax.random.PRNGKey(0)
    N, C, H, W = 2, 4, 16, 16
    x = jax.random.normal(key, (N, C, H, W), dtype=jnp.float32)

    # One-pass path, normalize=False (module default).
    out = jax.block_until_ready(spatial_soft_argmax(x, normalize=False))
    ref = _ssam_reference(x, normalize=False)
    assert out.shape == (N, 2 * C), out.shape
    assert jnp.allclose(out, ref, atol=1e-4, rtol=1e-4)

    # One-pass path, normalize=True.
    out_n = jax.block_until_ready(spatial_soft_argmax(x, normalize=True))
    ref_n = _ssam_reference(x, normalize=True)
    assert jnp.allclose(out_n, ref_n, atol=1e-5, rtol=1e-5)

    # Online-softmax (multi-chunk) path, forced with a small chunk so it is
    # exercised at tiny shapes; H != W also exercises the meshgrid quirk and
    # the partial-chunk lane mask (192 = 128 + 64).
    x2 = jax.random.normal(jax.random.PRNGKey(0), (2, 4, 16, 12), dtype=jnp.float32)
    out_m = jax.block_until_ready(
        spatial_soft_argmax(x2, normalize=False, _force_hw_chunk=128))
    ref_m = _ssam_reference(x2, normalize=False)
    assert jnp.allclose(out_m, ref_m, atol=1e-4, rtol=1e-4)

    print("KERNEL_OK")
</pallas_src>

<mosaic_0001>
module attributes {stable_mosaic.version = 11 : i64} {
  func.func @_ssam_onepass_kernel(%arg0: i32, %arg1: memref<8x256xf32, #tpu.memory_space<vmem>>, %arg2: memref<1x256xf32, #tpu.memory_space<vmem>>, %arg3: memref<1x256xf32, #tpu.memory_space<vmem>>, %arg4: memref<8x2xf32, #tpu.memory_space<vmem>>) attributes {dimension_semantics = [#tpu.dimension_semantics<parallel>], iteration_bounds = array<i64: 1>, scalar_prefetch = 0 : i64, scratch_operands = 0 : i64, tpu.core_type = #tpu.core_type<tc>, window_params = [{transform_indices = @transform_0, window_bounds = array<i64: 8, 256>}, {pipeline_mode = #tpu.pipeline_mode<synchronous>, transform_indices = @transform_1, window_bounds = array<i64: 1, 256>}, {pipeline_mode = #tpu.pipeline_mode<synchronous>, transform_indices = @transform_2, window_bounds = array<i64: 1, 256>}, {transform_indices = @transform_3, window_bounds = array<i64: 8, 2>}]} {
    %c0 = arith.constant 0 : index
    %c0_0 = arith.constant 0 : index
    %0 = vector.load %arg1[%c0, %c0_0] : memref<8x256xf32, #tpu.memory_space<vmem>>, vector<8x256xf32>
    %cst = arith.constant dense<0xFF800000> : vector<8xf32>
    %1 = vector.multi_reduction <maximumf>, %0, %cst [1] : vector<8x256xf32> to vector<8xf32>
    %2 = vector.shape_cast %1 : vector<8xf32> to vector<8x1xf32>
    %3 = vector.broadcast %2 : vector<8x1xf32> to vector<8x256xf32>
    %4 = arith.subf %0, %3 : vector<8x256xf32>
    %5 = math.exp %4 : vector<8x256xf32>
    %cst_1 = arith.constant dense<0.000000e+00> : vector<8xf32>
    %6 = vector.multi_reduction <add>, %5, %cst_1 [1] : vector<8x256xf32> to vector<8xf32>
    %7 = vector.shape_cast %6 : vector<8xf32> to vector<8x1xf32>
    %c0_2 = arith.constant 0 : index
    %c0_3 = arith.constant 0 : index
    %8 = vector.load %arg2[%c0_2, %c0_3] : memref<1x256xf32, #tpu.memory_space<vmem>>, vector<1x256xf32>
    %9 = vector.broadcast %8 : vector<1x256xf32> to vector<8x256xf32>
    %10 = arith.mulf %5, %9 : vector<8x256xf32>
    %cst_4 = arith.constant dense<0.000000e+00> : vector<8xf32>
    %11 = vector.multi_reduction <add>, %10, %cst_4 [1] : vector<8x256xf32> to vector<8xf32>
    %12 = vector.shape_cast %11 : vector<8xf32> to vector<8x1xf32>
    %c0_5 = arith.constant 0 : index
    %c0_6 = arith.constant 0 : index
    %13 = vector.load %arg3[%c0_5, %c0_6] : memref<1x256xf32, #tpu.memory_space<vmem>>, vector<1x256xf32>
    %14 = vector.broadcast %13 : vector<1x256xf32> to vector<8x256xf32>
    %15 = arith.mulf %5, %14 : vector<8x256xf32>
    %cst_7 = arith.constant dense<0.000000e+00> : vector<8xf32>
    %16 = vector.multi_reduction <add>, %15, %cst_7 [1] : vector<8x256xf32> to vector<8xf32>
    %17 = vector.shape_cast %16 : vector<8xf32> to vector<8x1xf32>
    %18 = arith.divf %12, %7 : vector<8x1xf32>
    %c0_8 = arith.constant 0 : index
    %c0_9 = arith.constant 0 : index
    %19 = vector.load %arg4[%c0_8, %c0_9] : memref<8x2xf32, #tpu.memory_space<vmem>>, vector<8x1xf32>
    tpu.vector_store %arg4[%c0_8, %c0_9], %18 {strides = array<i32>} : memref<8x2xf32, #tpu.memory_space<vmem>>, vector<8x1xf32>,
    %20 = arith.divf %17, %7 : vector<8x1xf32>
    %c0_10 = arith.constant 0 : index
    %c1 = arith.constant 1 : index
    %21 = vector.load %arg4[%c0_10, %c1] : memref<8x2xf32, #tpu.memory_space<vmem>>, vector<8x1xf32>
    tpu.vector_store %arg4[%c0_10, %c1], %20 {strides = array<i32>} : memref<8x2xf32, #tpu.memory_space<vmem>>, vector<8x1xf32>,
    return
  }
  func.func @transform_0(%arg0: i32) -> (i32, i32) {
    %c0_i32 = arith.constant 0 : i32
    %c0_i32_0 = arith.constant 0 : i32
    return %arg0, %c0_i32 : i32, i32
  }
  func.func @transform_1(%arg0: i32) -> (i32, i32) {
    %c0_i32 = arith.constant 0 : i32
    %c0_i32_0 = arith.constant 0 : i32
    %c0_i32_1 = arith.constant 0 : i32
    return %c0_i32, %c0_i32_0 : i32, i32
  }
  func.func @transform_2(%arg0: i32) -> (i32, i32) {
    %c0_i32 = arith.constant 0 : i32
    %c0_i32_0 = arith.constant 0 : i32
    %c0_i32_1 = arith.constant 0 : i32
    return %c0_i32, %c0_i32_0 : i32, i32
  }
  func.func @transform_3(%arg0: i32) -> (i32, i32) {
    %c0_i32 = arith.constant 0 : i32
    %c0_i32_0 = arith.constant 0 : i32
    return %arg0, %c0_i32 : i32, i32
  }
}

</mosaic_0001>

<llo_original>
// kernel: spatial_soft_argmax.1
$region0: #{spatial_soft_argmax.1}
  #allocation0 [shape = 'u32[]', space=smem, size = 0x4, offset = 0x4, fixed_abs, tag = 'smem constant byte address 0x4 - core index']
  #allocation1 [shape = 'u32[144,128]{1,0:T(1,128)}', space=vmem, size = 0x12000, scoped, tag = 'internal scratch']
  %s0 = inlined_call_operand.vmem [shape: f32[8,256], index: 0, kind: input, shape index: {}]
  %s1 = inlined_call_operand.vmem [shape: f32[1,256], index: 1, kind: input, shape index: {}]
  %s2 = inlined_call_operand.vmem [shape: f32[1,256], index: 2, kind: input, shape index: {}]
  %s3 = inlined_call_operand.vmem [shape: f32[8,2], index: 3, kind: output, shape index: {}]
  %s4 = sld [smem:[#allocation0]]
  $region22: #{spatial_soft_argmax.1} parent=0
    _
  %s6 = ssub.s32 1, %s4
  %s7 = scalar_select 0, %s6, %s4
  // Predicated region
  $region2: #{spatial_soft_argmax.1} parent=0 // pred_check
    _
  $region3: #{spatial_soft_argmax.1} parent=0 // pred_check_branch
    %9 = sbr.rel (0) target = $region5
  $region4: #{spatial_soft_argmax.1} parent=0 // pred_region
    _
  $region5: #{spatial_soft_argmax.1} parent=0 // pred_fallthru
    _
  // Predicated region
  $region6: #{spatial_soft_argmax.1} parent=0 // pred_check
    _
  $region7: #{spatial_soft_argmax.1} parent=0 // pred_check_branch
    %11 = sbr.rel (0) target = $region9
  $region8: #{spatial_soft_argmax.1} parent=0 // pred_region
    _
  $region9: #{spatial_soft_argmax.1} parent=0 // pred_fallthru
    _
  // Predicated region
  $region10: #{spatial_soft_argmax.1} parent=0 // pred_check
    _
  $region11: #{spatial_soft_argmax.1} parent=0 // pred_check_branch
    %13 = sbr.rel (0) target = $region13
  $region12: #{spatial_soft_argmax.1} parent=0 // pred_region
    _
  $region13: #{spatial_soft_argmax.1} parent=0 // pred_fallthru
    _
  %v14 = vld [vmem:[%s0] sm:$0xff]
  %v15 = vld [vmem:[%s0 + $0x8] sm:$0xff]
  %v16 = vmax.f32 %v14, %v15
  %17 = vmax.xlane.f32.xlu0 %v16
  %v18 = vpop.xlane.xlu0 %17
  %v19 = vsub.f32 %v14, %v18
  %v20 = vsub.f32 %v15, %v18
  %v21 = vmul.f32 %v19, 1.442695
  %v22 = vpow.pop %v21
  %v23 = vmul.f32 %v20, 1.442695
  %v24 = vpow.pop %v23
  %v25 = vadd.f32 %v22, %v24
  %26 = vadd.xlane.f32.xlu0 %v25
  %v27 = vpop.xlane.xlu0 %26
  %v28 = vld [vmem:[%s1] sm:$0x3]
  %v30 = vlaneseq
  %v31 = vshrl.u32 %v30, 7
  %v32 = vsub.s32 0, %v31
  %v33 = vrot.slane %v28, %v32
  %v34 = vlaneseq
  %v35 = vshrl.u32 %v34, 7
  %v36 = vsub.s32 1, %v35
  %v37 = vrot.slane %v28, %v36
  %v40 = vmul.f32 %v22, %v33
  %v41 = vmul.f32 %v24, %v37
  %v42 = vadd.f32 %v40, %v41
  %43 = vadd.xlane.f32.xlu0 %v42
  %v44 = vpop.xlane.xlu0 %43
  %v45 = vld [vmem:[%s2] sm:$0x3]
  %v47 = vlaneseq
  %v48 = vshrl.u32 %v47, 7
  %v49 = vsub.s32 0, %v48
  %v50 = vrot.slane %v45, %v49
  %v51 = vlaneseq
  %v52 = vshrl.u32 %v51, 7
  %v53 = vsub.s32 1, %v52
  %v54 = vrot.slane %v45, %v53
  %v57 = vmul.f32 %v22, %v50
  %v58 = vmul.f32 %v24, %v54
  %v59 = vadd.f32 %v57, %v58
  %60 = vadd.xlane.f32.xlu0 %v59
  %v61 = vpop.xlane.xlu0 %60
  %v62 = vrcp.pop %v27
  %v63 = vmul.f32 %v44, %v62
  %vm64 = vcmask 7168
  %65 = vst.msk [vmem:[%s3] sm:$0xff] %vm64, %v63
  %v66 = vmul.f32 %v61, %v62
  %vm67 = vcmask 15368
  %68 = vst.msk [vmem:[%s3] sm:$0xff] %vm67, %v66
  // Predicated region
  $region14: #{spatial_soft_argmax.1} parent=0 // pred_check
    _
  $region15: #{spatial_soft_argmax.1} parent=0 // pred_check_branch
    %70 = sbr.rel (0) target = $region17
  $region16: #{spatial_soft_argmax.1} parent=0 // pred_region
    _
  $region17: #{spatial_soft_argmax.1} parent=0 // pred_fallthru
    _
  // Predicated region
  $region18: #{spatial_soft_argmax.1} parent=0 // pred_check
    _
  $region19: #{spatial_soft_argmax.1} parent=0 // pred_check_branch
    %72 = sbr.rel (0) target = $region21
  $region20: #{spatial_soft_argmax.1} parent=0 // pred_region
    _
  $region21: #{spatial_soft_argmax.1} parent=0 // pred_fallthru
    _

</llo_original>
